<compile_context>
chip_gen: v5e
topology: v5e:2x2
jax: 0.10.0
libtpu: 0.0.40
codegen_flags: <defaults>
</compile_context>

<pallas_src>
import jax
import jax.numpy as jnp
from jax.experimental import pallas as pl
from jax.experimental.pallas import tpu as pltpu


def _round_up(x, m):
    return ((x + m - 1) // m) * m


def _cdiv(a, b):
    return -(-a // b)


def net_kernel(x_ref, wa_ref, w12_ref, w13_ref, bh_ref, w3_ref, o_ref):
    """Fused poly-expansion + MLP: x^2/x^3 on VPU, 4 MXU dots, ReLU, store.

    All biases are folded: bh holds (w2@b11 + b2 + b12 + b13) plus a 1.0 in the
    padded hidden column; the packed fc3 weight carries b3 in that row.
    """
    x = x_ref[...]
    x2 = x * x
    x3 = x2 * x
    h = jnp.dot(x, wa_ref[...], preferred_element_type=jnp.float32)
    h = h + jnp.dot(x2, w12_ref[...], preferred_element_type=jnp.float32)
    h = h + jnp.dot(x3, w13_ref[...], preferred_element_type=jnp.float32)
    h = jnp.maximum(h + bh_ref[...], 0.0)
    o_ref[...] = jnp.dot(
        h, w3_ref[...], preferred_element_type=jnp.float32
    ).astype(o_ref.dtype)


def init_linear(key, in_dim, out_dim):
    """PyTorch-style uniform(-1/sqrt(fan_in), 1/sqrt(fan_in)) init (deterministic)."""
    kw, kb = jax.random.split(key)
    bound = 1.0 / jnp.sqrt(jnp.float32(in_dim))
    w = jax.random.uniform(kw, (out_dim, in_dim), jnp.float32, -bound, bound)
    b = jax.random.uniform(kb, (out_dim,), jnp.float32, -bound, bound)
    return w, b


def pack_params(params):
    """Fold fc2 into fc11, pre-sum hidden biases, pack fc3 bias via a 1-column.

    Run ONCE outside the per-call path; the returned arrays are reusable
    constants for net_forward.
    """
    (w11, b11), (w12, b12), (w13, b13), (w2, b2), (w3, b3) = params
    H, D = w11.shape
    O = w3.shape[0]

    # fc2(fc11(x)) = x @ (w2 @ w11).T + (w2 @ b11 + b2)
    wa = (w2 @ w11).T                          # (D, H)
    bias_h = (w2 @ b11 + b2) + b12 + b13       # combined hidden bias (H,)

    H_pad = _round_up(H + 1, 128)              # +1 column for the constant-1 trick

    def pad_w(w_dh):                           # (D, H) -> (D, H_pad), zero padded
        return jnp.zeros((D, H_pad), jnp.float32).at[:, :H].set(w_dh)

    wa_p = pad_w(wa)
    w12_p = pad_w(w12.T)
    w13_p = pad_w(w13.T)

    bh = jnp.zeros((1, H_pad), jnp.float32)
    bh = bh.at[0, :H].set(bias_h)
    bh = bh.at[0, H].set(1.0)                  # constant-1 hidden column; relu(1)==1

    w3_p = jnp.zeros((H_pad, O), jnp.float32)
    w3_p = w3_p.at[:H, :].set(w3.T)
    w3_p = w3_p.at[H, :].set(b3)               # fc3 bias rides on the constant-1 column

    return wa_p, w12_p, w13_p, bh, w3_p


def _choose_tiling(B):
    """Batch tiling: ≤~2048-row tiles, ≥2 tiles when B>16 (v7x megacore), and
    padding waste bounded by a few rows (no round_up(B, TILE_B) blowup)."""
    B8 = _round_up(max(B, 1), 8)
    MAX_TILE = 2048
    if B8 <= 16:
        num_tiles = 1
    else:
        num_tiles = max(2, _cdiv(B8, MAX_TILE))
    tile_b = _round_up(_cdiv(B8, num_tiles), 8)
    b_pad = tile_b * num_tiles
    return tile_b, num_tiles, b_pad


def net_forward(x, packed):
    """Forward pass: raw x in, polynomial expansion fused inside the kernel."""
    wa_p, w12_p, w13_p, bh, w3_p = packed
    B, D = x.shape
    H_pad = wa_p.shape[1]
    O = w3_p.shape[1]

    tile_b, num_tiles, b_pad = _choose_tiling(B)

    x = x.astype(jnp.float32)
    if b_pad > B:
        x = jnp.pad(x, ((0, b_pad - B), (0, 0)))

    out = pl.pallas_call(
        net_kernel,
        out_shape=jax.ShapeDtypeStruct((b_pad, O), jnp.float32),
        grid=(num_tiles,),
        in_specs=[
            pl.BlockSpec((tile_b, D), lambda i: (i, 0)),       # raw x tile
            pl.BlockSpec((D, H_pad), lambda i: (0, 0)),        # folded fc2∘fc11 weight
            pl.BlockSpec((D, H_pad), lambda i: (0, 0)),        # fc12 weight
            pl.BlockSpec((D, H_pad), lambda i: (0, 0)),        # fc13 weight
            pl.BlockSpec((1, H_pad), lambda i: (0, 0)),        # fused hidden bias (+1 col)
            pl.BlockSpec((H_pad, O), lambda i: (0, 0)),        # fc3 weight (+ bias row)
        ],
        out_specs=pl.BlockSpec((tile_b, O), lambda i: (i, 0)),  # narrow O-wide output
        compiler_params=pltpu.CompilerParams(
            dimension_semantics=("parallel",),
        ),
    )(x, wa_p, w12_p, w13_p, bh, w3_p)

    return out[:B]


def net_forward_ref(x, params):
    """Pure-JAX reference matching the PyTorch forward exactly."""
    (w11, b11), (w12, b12), (w13, b13), (w2, b2), (w3, b3) = params
    x2 = x * x
    x3 = x * x * x
    h = (x @ w11.T + b11) @ w2.T + b2
    h = h + (x2 @ w12.T + b12)
    h = h + (x3 @ w13.T + b13)
    h = jnp.maximum(h, 0.0)
    return h @ w3.T + b3


if __name__ == "__main__":
    # Small shapes consistent with the module's forward.
    input_dim = 8
    hidden_dim = 32
    output_dim = 4
    batch = 8

    root = jax.random.PRNGKey(0)
    k_x, k11, k12, k13, k2, k3 = jax.random.split(root, 6)

    x = jax.random.normal(k_x, (batch, input_dim), jnp.float32)

    params = (
        init_linear(k11, input_dim, hidden_dim),   # fc11
        init_linear(k12, input_dim, hidden_dim),   # fc12
        init_linear(k13, input_dim, hidden_dim),   # fc13
        init_linear(k2, hidden_dim, hidden_dim),   # fc2
        init_linear(k3, hidden_dim, output_dim),   # fc3
    )

    # Pack once (hoisted out of the per-call path), then jit the forward.
    packed = jax.tree_util.tree_map(jax.block_until_ready, pack_params(params))
    fwd = jax.jit(net_forward)

    y = fwd(x, packed)
    y = jax.block_until_ready(y)

    y_ref = net_forward_ref(x, params)
    # Folding fc2∘fc11 and pre-summing biases re-associates f32 ops; differences
    # are ~1e-6 level, well inside this tolerance (real wiring bugs would be O(1)).
    assert y.shape == (batch, output_dim)
    assert jnp.allclose(y, y_ref, atol=1e-4, rtol=1e-4), "mismatch vs JAX reference"

    print("KERNEL_OK")
</pallas_src>

<mosaic_0001>
module attributes {stable_mosaic.version = 11 : i64} {
  func.func @net_kernel(%arg0: i32, %arg1: memref<8x8xf32, #tpu.memory_space<vmem>>, %arg2: memref<8x128xf32, #tpu.memory_space<vmem>>, %arg3: memref<8x128xf32, #tpu.memory_space<vmem>>, %arg4: memref<8x128xf32, #tpu.memory_space<vmem>>, %arg5: memref<1x128xf32, #tpu.memory_space<vmem>>, %arg6: memref<128x4xf32, #tpu.memory_space<vmem>>, %arg7: memref<8x4xf32, #tpu.memory_space<vmem>>) attributes {dimension_semantics = [#tpu.dimension_semantics<parallel>], iteration_bounds = array<i64: 1>, scalar_prefetch = 0 : i64, scratch_operands = 0 : i64, tpu.core_type = #tpu.core_type<tc>, window_params = [{transform_indices = @transform_0, window_bounds = array<i64: 8, 8>}, {pipeline_mode = #tpu.pipeline_mode<synchronous>, transform_indices = @transform_1, window_bounds = array<i64: 8, 128>}, {pipeline_mode = #tpu.pipeline_mode<synchronous>, transform_indices = @transform_2, window_bounds = array<i64: 8, 128>}, {pipeline_mode = #tpu.pipeline_mode<synchronous>, transform_indices = @transform_3, window_bounds = array<i64: 8, 128>}, {pipeline_mode = #tpu.pipeline_mode<synchronous>, transform_indices = @transform_4, window_bounds = array<i64: 1, 128>}, {pipeline_mode = #tpu.pipeline_mode<synchronous>, transform_indices = @transform_5, window_bounds = array<i64: 128, 4>}, {transform_indices = @transform_6, window_bounds = array<i64: 8, 4>}]} {
    %c0 = arith.constant 0 : index
    %c0_0 = arith.constant 0 : index
    %0 = vector.load %arg1[%c0, %c0_0] : memref<8x8xf32, #tpu.memory_space<vmem>>, vector<8x8xf32>
    %1 = arith.mulf %0, %0 : vector<8x8xf32>
    %2 = arith.mulf %1, %0 : vector<8x8xf32>
    %c0_1 = arith.constant 0 : index
    %c0_2 = arith.constant 0 : index
    %3 = vector.load %arg2[%c0_1, %c0_2] : memref<8x128xf32, #tpu.memory_space<vmem>>, vector<8x128xf32>
    %cst = arith.constant dense<0.000000e+00> : vector<8x128xf32>
    %4 = tpu.matmul %0, %3, %cst {dimension_numbers = #tpu.dot_dimension_numbers<[1], [0], [0], [1], [0, 0, 1, 1], [], []>} : vector<8x8xf32>, vector<8x128xf32>, vector<8x128xf32> -> vector<8x128xf32>
    %c0_3 = arith.constant 0 : index
    %c0_4 = arith.constant 0 : index
    %5 = vector.load %arg3[%c0_3, %c0_4] : memref<8x128xf32, #tpu.memory_space<vmem>>, vector<8x128xf32>
    %cst_5 = arith.constant dense<0.000000e+00> : vector<8x128xf32>
    %6 = tpu.matmul %1, %5, %cst_5 {dimension_numbers = #tpu.dot_dimension_numbers<[1], [0], [0], [1], [0, 0, 1, 1], [], []>} : vector<8x8xf32>, vector<8x128xf32>, vector<8x128xf32> -> vector<8x128xf32>
    %7 = arith.addf %4, %6 : vector<8x128xf32>
    %c0_6 = arith.constant 0 : index
    %c0_7 = arith.constant 0 : index
    %8 = vector.load %arg4[%c0_6, %c0_7] : memref<8x128xf32, #tpu.memory_space<vmem>>, vector<8x128xf32>
    %cst_8 = arith.constant dense<0.000000e+00> : vector<8x128xf32>
    %9 = tpu.matmul %2, %8, %cst_8 {dimension_numbers = #tpu.dot_dimension_numbers<[1], [0], [0], [1], [0, 0, 1, 1], [], []>} : vector<8x8xf32>, vector<8x128xf32>, vector<8x128xf32> -> vector<8x128xf32>
    %10 = arith.addf %7, %9 : vector<8x128xf32>
    %c0_9 = arith.constant 0 : index
    %c0_10 = arith.constant 0 : index
    %11 = vector.load %arg5[%c0_9, %c0_10] : memref<1x128xf32, #tpu.memory_space<vmem>>, vector<1x128xf32>
    %12 = vector.broadcast %11 : vector<1x128xf32> to vector<8x128xf32>
    %13 = arith.addf %10, %12 : vector<8x128xf32>
    %cst_11 = arith.constant 0.000000e+00 : f32
    %14 = vector.broadcast %cst_11 : f32 to vector<8x128xf32>
    %15 = arith.maximumf %13, %14 : vector<8x128xf32>
    %c0_12 = arith.constant 0 : index
    %c0_13 = arith.constant 0 : index
    %16 = vector.load %arg6[%c0_12, %c0_13] : memref<128x4xf32, #tpu.memory_space<vmem>>, vector<128x4xf32>
    %cst_14 = arith.constant dense<0.000000e+00> : vector<8x4xf32>
    %17 = tpu.matmul %15, %16, %cst_14 {dimension_numbers = #tpu.dot_dimension_numbers<[1], [0], [0], [1], [0, 0, 1, 1], [], []>} : vector<8x128xf32>, vector<128x4xf32>, vector<8x4xf32> -> vector<8x4xf32>
    %c0_15 = arith.constant 0 : index
    %c0_16 = arith.constant 0 : index
    %18 = vector.load %arg7[%c0_15, %c0_16] : memref<8x4xf32, #tpu.memory_space<vmem>>, vector<8x4xf32>
    tpu.vector_store %arg7[%c0_15, %c0_16], %17 {strides = array<i32>} : memref<8x4xf32, #tpu.memory_space<vmem>>, vector<8x4xf32>,
    return
  }
  func.func @transform_0(%arg0: i32) -> (i32, i32) {
    %c0_i32 = arith.constant 0 : i32
    %c0_i32_0 = arith.constant 0 : i32
    return %arg0, %c0_i32 : i32, i32
  }
  func.func @transform_1(%arg0: i32) -> (i32, i32) {
    %c0_i32 = arith.constant 0 : i32
    %c0_i32_0 = arith.constant 0 : i32
    %c0_i32_1 = arith.constant 0 : i32
    return %c0_i32, %c0_i32_0 : i32, i32
  }
  func.func @transform_2(%arg0: i32) -> (i32, i32) {
    %c0_i32 = arith.constant 0 : i32
    %c0_i32_0 = arith.constant 0 : i32
    %c0_i32_1 = arith.constant 0 : i32
    return %c0_i32, %c0_i32_0 : i32, i32
  }
  func.func @transform_3(%arg0: i32) -> (i32, i32) {
    %c0_i32 = arith.constant 0 : i32
    %c0_i32_0 = arith.constant 0 : i32
    %c0_i32_1 = arith.constant 0 : i32
    return %c0_i32, %c0_i32_0 : i32, i32
  }
  func.func @transform_4(%arg0: i32) -> (i32, i32) {
    %c0_i32 = arith.constant 0 : i32
    %c0_i32_0 = arith.constant 0 : i32
    %c0_i32_1 = arith.constant 0 : i32
    return %c0_i32, %c0_i32_0 : i32, i32
  }
  func.func @transform_5(%arg0: i32) -> (i32, i32) {
    %c0_i32 = arith.constant 0 : i32
    %c0_i32_0 = arith.constant 0 : i32
    %c0_i32_1 = arith.constant 0 : i32
    return %c0_i32, %c0_i32_0 : i32, i32
  }
  func.func @transform_6(%arg0: i32) -> (i32, i32) {
    %c0_i32 = arith.constant 0 : i32
    %c0_i32_0 = arith.constant 0 : i32
    return %arg0, %c0_i32 : i32, i32
  }
}

</mosaic_0001>

<llo_original>
// kernel: net_forward.1
$region0: #{net_forward.1}
  #allocation0 [shape = 'u32[]', space=smem, size = 0x4, offset = 0x4, fixed_abs, tag = 'smem constant byte address 0x4 - core index']
  #allocation1 [shape = 'u32[72,128]{1,0:T(1,128)}', space=vmem, size = 0x9000, scoped, tag = 'internal scratch']
  %s0 = inlined_call_operand.vmem [shape: f32[8,8], index: 0, kind: input, shape index: {}]
  %s1 = inlined_call_operand.vmem [shape: f32[8,128], index: 1, kind: input, shape index: {}]
  %s2 = inlined_call_operand.vmem [shape: f32[8,128], index: 2, kind: input, shape index: {}]
  %s3 = inlined_call_operand.vmem [shape: f32[8,128], index: 3, kind: input, shape index: {}]
  %s4 = inlined_call_operand.vmem [shape: f32[1,128], index: 4, kind: input, shape index: {}]
  %s5 = inlined_call_operand.vmem [shape: f32[128,4], index: 5, kind: input, shape index: {}]
  %s6 = inlined_call_operand.vmem [shape: f32[8,4], index: 6, kind: output, shape index: {}]
  %s7 = sld [smem:[#allocation0]]
  $region34: #{net_forward.1} parent=0
    _
  %s9 = ssub.s32 1, %s7
  %s10 = scalar_select 0, %s9, %s7
  // Predicated region
  $region2: #{net_forward.1} parent=0 // pred_check
    _
  $region3: #{net_forward.1} parent=0 // pred_check_branch
    %12 = sbr.rel (0) target = $region5
  $region4: #{net_forward.1} parent=0 // pred_region
    _
  $region5: #{net_forward.1} parent=0 // pred_fallthru
    _
  // Predicated region
  $region6: #{net_forward.1} parent=0 // pred_check
    _
  $region7: #{net_forward.1} parent=0 // pred_check_branch
    %14 = sbr.rel (0) target = $region9
  $region8: #{net_forward.1} parent=0 // pred_region
    _
  $region9: #{net_forward.1} parent=0 // pred_fallthru
    _
  // Predicated region
  $region10: #{net_forward.1} parent=0 // pred_check
    _
  $region11: #{net_forward.1} parent=0 // pred_check_branch
    %16 = sbr.rel (0) target = $region13
  $region12: #{net_forward.1} parent=0 // pred_region
    _
  $region13: #{net_forward.1} parent=0 // pred_fallthru
    _
  // Predicated region
  $region14: #{net_forward.1} parent=0 // pred_check
    _
  $region15: #{net_forward.1} parent=0 // pred_check_branch
    %18 = sbr.rel (0) target = $region17
  $region16: #{net_forward.1} parent=0 // pred_region
    _
  $region17: #{net_forward.1} parent=0 // pred_fallthru
    _
  // Predicated region
  $region18: #{net_forward.1} parent=0 // pred_check
    _
  $region19: #{net_forward.1} parent=0 // pred_check_branch
    %20 = sbr.rel (0) target = $region21
  $region20: #{net_forward.1} parent=0 // pred_region
    _
  $region21: #{net_forward.1} parent=0 // pred_fallthru
    _
  // Predicated region
  $region22: #{net_forward.1} parent=0 // pred_check
    _
  $region23: #{net_forward.1} parent=0 // pred_check_branch
    %22 = sbr.rel (0) target = $region25
  $region24: #{net_forward.1} parent=0 // pred_region
    _
  $region25: #{net_forward.1} parent=0 // pred_fallthru
    _
  %v23 = vld [vmem:[%s0] sm:$0xff]
  %v24 = vmul.f32 %v23, %v23
  %v25 = vmul.f32 %v24, %v23
  %v26 = vld [vmem:[%s1] sm:$0xff]
  %v27 = vld [vmem:[%s2] sm:$0xff]
  %vm28 = vcmask 64512
  %v30 = vsel %vm28, %v24, 0
  %32 = vmatpush.msra.mxu0 0.0
  %33 = vmatpush.msra.mxu0 0.0
  %34 = vmatpush.msra.mxu0 0.0
  %35 = vmatpush.msra.mxu0 0.0
  %36 = vmatpush.msra.mxu0 0.0
  %37 = vmatpush.msra.mxu0 0.0
  %38 = vmatpush.msra.mxu0 0.0
  %39 = vmatpush.msra.mxu0 0.0
  %40 = vmatpush.msra.mxu0 0.0
  %41 = vmatpush.msra.mxu0 0.0
  %42 = vmatpush.msra.mxu0 0.0
  %43 = vmatpush.msra.mxu0 0.0
  %44 = vmatpush.msra.mxu0 0.0
  %45 = vmatpush.msra.mxu0 0.0
  %46 = vmatpush.msra.mxu0 0.0
  %47 = vmatpush.msra.mxu0 %v27
  %48 = vmatmul.f32.gmra.mxu0 %v30
  %v49 = vpop.f32.mrf.mxu0
  %v50 = vadd.f32 0.0, %v49
  %51 = vdwg.mxu0
  %v53 = vsel %vm28, %v23, 0
  %55 = vmatpush.msra.mxu0 0.0
  %56 = vmatpush.msra.mxu0 0.0
  %57 = vmatpush.msra.mxu0 0.0
  %58 = vmatpush.msra.mxu0 0.0
  %59 = vmatpush.msra.mxu0 0.0
  %60 = vmatpush.msra.mxu0 0.0
  %61 = vmatpush.msra.mxu0 0.0
  %62 = vmatpush.msra.mxu0 0.0
  %63 = vmatpush.msra.mxu0 0.0
  %64 = vmatpush.msra.mxu0 0.0
  %65 = vmatpush.msra.mxu0 0.0
  %66 = vmatpush.msra.mxu0 0.0
  %67 = vmatpush.msra.mxu0 0.0
  %68 = vmatpush.msra.mxu0 0.0
  %69 = vmatpush.msra.mxu0 0.0
  %70 = vmatpush.msra.mxu0 %v26
  %71 = vmatmul.f32.gmra.mxu0 %v53
  %v72 = vpop.f32.mrf.mxu0
  %v73 = vadd.f32 %v50, %v72
  %74 = vdwg.mxu0
  %v75 = vld [vmem:[%s3] sm:$0xff]
  %v77 = vsel %vm28, %v25, 0
  %79 = vmatpush.msra.mxu0 0.0
  %80 = vmatpush.msra.mxu0 0.0
  %81 = vmatpush.msra.mxu0 0.0
  %82 = vmatpush.msra.mxu0 0.0
  %83 = vmatpush.msra.mxu0 0.0
  %84 = vmatpush.msra.mxu0 0.0
  %85 = vmatpush.msra.mxu0 0.0
  %86 = vmatpush.msra.mxu0 0.0
  %87 = vmatpush.msra.mxu0 0.0
  %88 = vmatpush.msra.mxu0 0.0
  %89 = vmatpush.msra.mxu0 0.0
  %90 = vmatpush.msra.mxu0 0.0
  %91 = vmatpush.msra.mxu0 0.0
  %92 = vmatpush.msra.mxu0 0.0
  %93 = vmatpush.msra.mxu0 0.0
  %94 = vmatpush.msra.mxu0 %v75
  %95 = vmatmul.f32.gmra.mxu0 %v77
  %v96 = vpop.f32.mrf.mxu0
  %v97 = vadd.f32 0.0, %v96
  %98 = vdwg.mxu0
  %v99 = vadd.f32 %v73, %v97
  %v100 = vld [vmem:[%s4] sm:$0x1]
  %v102 = vperm.slane %v100, 0
  %v104 = vadd.f32 %v99, %v102
  %v105 = vmax.f32 %v104, 0.0
  %v106 = vld [vmem:[%s5] sm:$0xff]
  %v107 = vld [vmem:[%s5 + $0x8] sm:$0xff]
  %v108 = vld [vmem:[%s5 + $0x10] sm:$0xff]
  %v109 = vld [vmem:[%s5 + $0x18] sm:$0xff]
  %v110 = vld [vmem:[%s5 + $0x20] sm:$0xff]
  %v111 = vld [vmem:[%s5 + $0x28] sm:$0xff]
  %v112 = vld [vmem:[%s5 + $0x30] sm:$0xff]
  %v113 = vld [vmem:[%s5 + $0x38] sm:$0xff]
  %v114 = vld [vmem:[%s5 + $0x40] sm:$0xff]
  %v115 = vld [vmem:[%s5 + $0x48] sm:$0xff]
  %v116 = vld [vmem:[%s5 + $0x50] sm:$0xff]
  %v117 = vld [vmem:[%s5 + $0x58] sm:$0xff]
  %v118 = vld [vmem:[%s5 + $0x60] sm:$0xff]
  %v119 = vld [vmem:[%s5 + $0x68] sm:$0xff]
  %v120 = vld [vmem:[%s5 + $0x70] sm:$0xff]
  %v121 = vld [vmem:[%s5 + $0x78] sm:$0xff]
  %122 = vmatpush.msra.mxu0 %v121
  %123 = vmatpush.msra.mxu0 %v120
  %124 = vmatpush.msra.mxu0 %v119
  %125 = vmatpush.msra.mxu0 %v118
  %126 = vmatpush.msra.mxu0 %v117
  %127 = vmatpush.msra.mxu0 %v116
  %128 = vmatpush.msra.mxu0 %v115
  %129 = vmatpush.msra.mxu0 %v114
  %130 = vmatpush.msra.mxu0 %v113
  %131 = vmatpush.msra.mxu0 %v112
  %132 = vmatpush.msra.mxu0 %v111
  %133 = vmatpush.msra.mxu0 %v110
  %134 = vmatpush.msra.mxu0 %v109
  %135 = vmatpush.msra.mxu0 %v108
  %136 = vmatpush.msra.mxu0 %v107
  %137 = vmatpush.msra.mxu0 %v106
  %138 = vmatmul.f32.gmra.mxu0 %v105
  %v139 = vpop.f32.mrf.mxu0
  %v140 = vadd.f32 0.0, %v139
  %141 = vdwg.mxu0
  %vm142 = vcmask 31744
  %143 = vst.msk [vmem:[%s6] sm:$0xff] %vm142, %v140
  // Predicated region
  $region26: #{net_forward.1} parent=0 // pred_check
    _
  $region27: #{net_forward.1} parent=0 // pred_check_branch
    %145 = sbr.rel (0) target = $region29
  $region28: #{net_forward.1} parent=0 // pred_region
    _
  $region29: #{net_forward.1} parent=0 // pred_fallthru
    _
  // Predicated region
  $region30: #{net_forward.1} parent=0 // pred_check
    _
  $region31: #{net_forward.1} parent=0 // pred_check_branch
    %147 = sbr.rel (0) target = $region33
  $region32: #{net_forward.1} parent=0 // pred_region
    _
  $region33: #{net_forward.1} parent=0 // pred_fallthru
    _

</llo_original>
